<compile_context>
chip_gen: v6e
topology: v6e:2x2x1
jax: 0.10.0
libtpu: 0.0.40
codegen_flags: <defaults>
</compile_context>

<pallas_src>
import functools

import jax
import jax.numpy as jnp
from jax.experimental import pallas as pl
from jax.experimental.pallas import tpu as pltpu


def gce_kernel(labels_ref, logits_ref, out_ref, *, q, eps, lane_dense_out):
    # logits_ref: (block_n, C) f32/bf16; labels_ref: (block_n, 1) int32
    # out_ref: (1, block_n) f32 if lane_dense_out else (block_n, 1) f32
    x = logits_ref[...]                              # native dtype, no f32 copy
    labels = labels_ref[...]                         # (block_n, 1) int32

    # Row max in the input dtype (max is a selection -> exact); subtract + exp
    # in f32 (required on v5e: no bf16 VPU/EUP).  The cast is folded into the
    # elementwise chain, so no separate (block_n, C) f32 buffer is kept live.
    m = jnp.max(x, axis=1, keepdims=True)            # (block_n, 1)
    e = jnp.exp(x.astype(jnp.float32) - m.astype(jnp.float32))  # (block_n, C)

    # Gather e[i, labels[i]] with a lane-iota one-hot select (no full softmax
    # normalization of the whole tile, exactly one exp per element).
    col = jax.lax.broadcasted_iota(jnp.int32, e.shape, 1)
    num = jnp.sum(jnp.where(col == labels, e, 0.0), axis=1, keepdims=True)
    den = jnp.sum(e, axis=1, keepdims=True)

    # f_j = softmax(x)[i, label_i] + eps ; exact divide keeps 1e-5 tolerance.
    f_j = num / den + eps                            # (block_n, 1), in (0, 1+eps]
    # f_j ** q written explicitly as exp(q * log(f_j)) (f_j > 0 always).
    loss_col = (1.0 - jnp.exp(q * jnp.log(f_j))) * (1.0 / q)   # (block_n, 1)

    if lane_dense_out:
        # Direct O(block_n) relayout to a lane-dense (1, block_n) row (XLU
        # transpose) -> unmasked full-lane stores of the output block.
        out_ref[...] = jnp.transpose(loss_col).astype(out_ref.dtype)
    else:
        out_ref[...] = loss_col.astype(out_ref.dtype)


def _round_up(x, m):
    return ((x + m - 1) // m) * m


def _vmem_params():
    """(tile-sizing budget, vmem_limit_bytes) derived from this chip's VMEM."""
    default_cap = 64 * 1024 * 1024          # conservative (v7x-sized) fallback
    try:
        cap = int(getattr(pltpu.get_tpu_info(), "vmem_capacity_bytes", default_cap))
    except Exception:
        cap = default_cap
    budget = min(cap // 3, 40 * 1024 * 1024)     # per-step working-set budget
    limit = max(32 * 1024 * 1024, min(int(cap * 0.6), 100 * 1024 * 1024))
    return budget, limit


def _pick_block_n(n_rows, n_classes, in_itemsize, vmem_budget):
    """Return (block_n, lane_dense_out)."""
    # Per-row VMEM bytes for one grid step (everything that scales with rows):
    #   logits block, double-buffered ................ 2 * C * itemsize
    #   C-wide f32/i32 temporaries (exp, iota,
    #   masked exp, fused-cast headroom) ............. 4 * C * 4
    #   labels (bn, 1) i32 block, lane-padded to 128,
    #   double-buffered .............................. 2 * 128 * 4
    #   output (1, bn) f32 block, sublane-padded to 8,
    #   double-buffered .............................. 2 * 8 * 4
    per_row = n_classes * (2 * in_itemsize + 16) + 1024 + 64
    fit_rows = max(vmem_budget // per_row, 8)
    # Keep >= ~8 grid steps so the "parallel" row axis can shard across v7x's
    # two TensorCores; hard-cap the tile height at 4096 rows.
    steps_cap = _round_up(pl.cdiv(n_rows, 8), 128)
    bn = min(fit_rows, 4096, steps_cap)
    if bn >= 128 and n_rows > 128:
        return (bn // 128) * 128, True            # lane-dense (1, block_n) output
    if n_rows <= max(bn, 128) and fit_rows >= n_rows:
        return n_rows, True                        # single full-extent block
    # VMEM-constrained fallback for very large C: small row tiles, plain
    # (N, 1) column output.  TODO(synk): replace with a C-tiled online-softmax.
    bn = max((min(bn, n_rows) // 8) * 8, 8)
    return bn, False


def gce_loss(outputs, labels, *, q=0.7, eps=1e-7, block_n=None):
    """outputs: (N, C) float logits (f32 or bf16), labels: (N,) int -> (N, 1) f32."""
    N, C = outputs.shape
    budget, vmem_limit = _vmem_params()
    if block_n is None:
        block_n, lane_dense = _pick_block_n(
            N, C, jnp.dtype(outputs.dtype).itemsize, budget)
    else:
        lane_dense = (block_n % 128 == 0) or (block_n == N)

    # Only the labels get a (cheap, N*4-byte) reshape; the logits are consumed
    # in place -- ragged tails are handled by the cdiv grid, not by padding.
    labels2d = labels.astype(jnp.int32).reshape(N, 1)

    grid = (pl.cdiv(N, block_n),)
    kernel = functools.partial(gce_kernel, q=q, eps=eps, lane_dense_out=lane_dense)
    in_specs = [
        pl.BlockSpec((block_n, 1), lambda i: (i, 0)),    # labels column
        pl.BlockSpec((block_n, C), lambda i: (i, 0)),    # logits tile
    ]
    cparams = pltpu.CompilerParams(
        dimension_semantics=("parallel",),
        vmem_limit_bytes=vmem_limit,
    )

    if lane_dense:
        out = pl.pallas_call(
            kernel,
            out_shape=jax.ShapeDtypeStruct((1, N), jnp.float32),
            grid=grid,
            in_specs=in_specs,
            out_specs=pl.BlockSpec((1, block_n), lambda i: (0, i)),
            compiler_params=cparams,
        )(labels2d, outputs)
        return out.reshape(N, 1)

    out = pl.pallas_call(
        kernel,
        out_shape=jax.ShapeDtypeStruct((N, 1), jnp.float32),
        grid=grid,
        in_specs=in_specs,
        out_specs=pl.BlockSpec((block_n, 1), lambda i: (i, 0)),
        compiler_params=cparams,
    )(labels2d, outputs)
    return out


def gce_loss_ref(outputs, labels, q=0.7, eps=1e-7):
    p = jax.nn.softmax(outputs.astype(jnp.float32), axis=1)
    f_j = jnp.take_along_axis(p, labels[:, None].astype(jnp.int32), axis=1) + eps
    return (1.0 - jnp.power(f_j, q)) / q


if __name__ == "__main__":
    key = jax.random.PRNGKey(0)
    k1, k2, k3, k4 = jax.random.split(key, 4)

    # Primary small test: batch of 16 examples, 32 classes (module's (N, C) / (N,)).
    N, C = 16, 32
    outputs = jax.random.normal(k1, (N, C), dtype=jnp.float32)
    labels = jax.random.randint(k2, (N,), 0, C, dtype=jnp.int32)

    loss = jax.block_until_ready(gce_loss(outputs, labels, q=0.7, eps=1e-7))
    ref = gce_loss_ref(outputs, labels)
    assert loss.shape == (N, 1)
    assert jnp.max(jnp.abs(loss - ref)) < 1e-5, "mismatch vs reference (small)"

    # Second test: multi-block grid with a ragged tail (no logits padding).
    N2, C2 = 200, 32
    outputs2 = jax.random.normal(k3, (N2, C2), dtype=jnp.float32)
    labels2 = jax.random.randint(k4, (N2,), 0, C2, dtype=jnp.int32)

    loss2 = jax.block_until_ready(gce_loss(outputs2, labels2))
    ref2 = gce_loss_ref(outputs2, labels2)
    assert loss2.shape == (N2, 1)
    assert jnp.max(jnp.abs(loss2 - ref2)) < 1e-5, "mismatch vs reference (ragged)"

    print("KERNEL_OK")
</pallas_src>

<mosaic_0001>
module attributes {stable_mosaic.version = 11 : i64} {
  func.func @gce_kernel(%arg0: i32, %arg1: memref<16x1xi32, #tpu.memory_space<vmem>>, %arg2: memref<16x32xf32, #tpu.memory_space<vmem>>, %arg3: memref<1x16xf32, #tpu.memory_space<vmem>>) attributes {dimension_semantics = [#tpu.dimension_semantics<parallel>], iteration_bounds = array<i64: 1>, scalar_prefetch = 0 : i64, scratch_operands = 0 : i64, tpu.core_type = #tpu.core_type<tc>, window_params = [{transform_indices = @transform_0, window_bounds = array<i64: 16, 1>}, {transform_indices = @transform_1, window_bounds = array<i64: 16, 32>}, {transform_indices = @transform_2, window_bounds = array<i64: 1, 16>}]} {
    %c0 = arith.constant 0 : index
    %c0_0 = arith.constant 0 : index
    %0 = vector.load %arg2[%c0, %c0_0] : memref<16x32xf32, #tpu.memory_space<vmem>>, vector<16x32xf32>
    %c0_1 = arith.constant 0 : index
    %c0_2 = arith.constant 0 : index
    %1 = vector.load %arg1[%c0_1, %c0_2] : memref<16x1xi32, #tpu.memory_space<vmem>>, vector<16x1xi32>
    %cst = arith.constant dense<0xFF800000> : vector<16xf32>
    %2 = vector.multi_reduction <maximumf>, %0, %cst [1] : vector<16x32xf32> to vector<16xf32>
    %3 = vector.shape_cast %2 : vector<16xf32> to vector<16x1xf32>
    %4 = vector.broadcast %3 : vector<16x1xf32> to vector<16x32xf32>
    %5 = arith.subf %0, %4 : vector<16x32xf32>
    %6 = math.exp %5 : vector<16x32xf32>
    %7 = tpu.iota {dimensions = array<i32: 1>} : vector<16x32xi32>
    %8 = vector.broadcast %1 : vector<16x1xi32> to vector<16x32xi32>
    %9 = arith.cmpi eq, %7, %8 : vector<16x32xi32>
    %cst_3 = arith.constant 0.000000e+00 : f32
    %10 = vector.broadcast %cst_3 : f32 to vector<16x32xf32>
    %11 = arith.select %9, %6, %10 : vector<16x32xi1>, vector<16x32xf32>
    %cst_4 = arith.constant dense<0.000000e+00> : vector<16xf32>
    %12 = vector.multi_reduction <add>, %11, %cst_4 [1] : vector<16x32xf32> to vector<16xf32>
    %13 = vector.shape_cast %12 : vector<16xf32> to vector<16x1xf32>
    %cst_5 = arith.constant dense<0.000000e+00> : vector<16xf32>
    %14 = vector.multi_reduction <add>, %6, %cst_5 [1] : vector<16x32xf32> to vector<16xf32>
    %15 = vector.shape_cast %14 : vector<16xf32> to vector<16x1xf32>
    %16 = arith.divf %13, %15 : vector<16x1xf32>
    %cst_6 = arith.constant 1.000000e-07 : f32
    %17 = vector.broadcast %cst_6 : f32 to vector<16x1xf32>
    %18 = arith.addf %16, %17 : vector<16x1xf32>
    %19 = math.log %18 : vector<16x1xf32>
    %cst_7 = arith.constant 0.699999988 : f32
    %20 = vector.broadcast %cst_7 : f32 to vector<16x1xf32>
    %21 = arith.mulf %20, %19 : vector<16x1xf32>
    %22 = math.exp %21 : vector<16x1xf32>
    %cst_8 = arith.constant 1.000000e+00 : f32
    %23 = vector.broadcast %cst_8 : f32 to vector<16x1xf32>
    %24 = arith.subf %23, %22 : vector<16x1xf32>
    %cst_9 = arith.constant 1.42857146 : f32
    %25 = vector.broadcast %cst_9 : f32 to vector<16x1xf32>
    %26 = arith.mulf %24, %25 : vector<16x1xf32>
    %27 = tpu.transpose %26, [1, 0] : vector<16x1xf32> -> vector<1x16xf32>
    %c0_10 = arith.constant 0 : index
    %c0_11 = arith.constant 0 : index
    %28 = vector.load %arg3[%c0_10, %c0_11] : memref<1x16xf32, #tpu.memory_space<vmem>>, vector<1x16xf32>
    tpu.vector_store %arg3[%c0_10, %c0_11], %27 {strides = array<i32>} : memref<1x16xf32, #tpu.memory_space<vmem>>, vector<1x16xf32>,
    return
  }
  func.func @transform_0(%arg0: i32) -> (i32, i32) {
    %c0_i32 = arith.constant 0 : i32
    %c0_i32_0 = arith.constant 0 : i32
    return %arg0, %c0_i32 : i32, i32
  }
  func.func @transform_1(%arg0: i32) -> (i32, i32) {
    %c0_i32 = arith.constant 0 : i32
    %c0_i32_0 = arith.constant 0 : i32
    return %arg0, %c0_i32 : i32, i32
  }
  func.func @transform_2(%arg0: i32) -> (i32, i32) {
    %c0_i32 = arith.constant 0 : i32
    %c0_i32_0 = arith.constant 0 : i32
    return %c0_i32, %arg0 : i32, i32
  }
}

</mosaic_0001>

<llo_original>
// kernel: tpu_custom_call.1
$region0: #{tpu_custom_call.1}
  #allocation0 [shape = 'u32[]', space=smem, size = 0x4, offset = 0x4, fixed_abs, tag = 'smem constant byte address 0x4 - core index']
  #allocation1 [shape = 'u32[144,128]{1,0:T(1,128)}', space=vmem, size = 0x12000, scoped, tag = 'internal scratch']
  %s0 = inlined_call_operand.vmem [shape: s32[16,1], index: 0, kind: input, shape index: {}]
  %s1 = inlined_call_operand.vmem [shape: f32[16,32], index: 1, kind: input, shape index: {}]
  %s2 = inlined_call_operand.hbm [shape: f32[1,16], index: 2, kind: output, shape index: {}]
  %s3 = sld [smem:[#allocation0]]
  $region18: #{tpu_custom_call.1} parent=0
    _
  %s5 = ssub.s32 1, %s3
  %s6 = scalar_select 0, %s5, %s3
  $region1: #{tpu_custom_call.1} parent=0
    #allocation2 [shape = 'u8[512]{0}', space=vmem, size = 0x400, scoped, tag = 'output window, operand 0, single buffered']
    #allocation3 [shape = 's32[1]{0}', space=sflag, size = 0x4, scoped, tag = 'scoped memory for tpu_custom_call.1']
    %7 = vsyncpa [#allocation3], 0
    // Predicated region
    $region2: #{tpu_custom_call.1} parent=1 // pred_check
      _
    $region3: #{tpu_custom_call.1} parent=1 // pred_check_branch
      %9 = sbr.rel (0) target = $region5
    $region4: #{tpu_custom_call.1} parent=1 // pred_region
      _
    $region5: #{tpu_custom_call.1} parent=1 // pred_fallthru
      _
    // Predicated region
    $region6: #{tpu_custom_call.1} parent=1 // pred_check
      _
    $region7: #{tpu_custom_call.1} parent=1 // pred_check_branch
      %11 = sbr.rel (0) target = $region9
    $region8: #{tpu_custom_call.1} parent=1 // pred_region
      _
    $region9: #{tpu_custom_call.1} parent=1 // pred_fallthru
      _
    %v12 = vld [vmem:[%s1] sm:$0xff]
    %v13 = vld [vmem:[%s1 + $0x8] sm:$0xff]
    %v14 = vld [vmem:[%s0] sm:$0xff]
    %v15 = vld [vmem:[%s0 + $0x8] sm:$0xff]
    %vm16 = vcmask 261120
    %v17 = vsel %vm16, %v12, -inf
    %18 = vmax.xlane.f32.xlu0 %v17
    %v19 = vpop.xlane.xlu0 %18
    %v20 = vsel %vm16, %v13, -inf
    %21 = vmax.xlane.f32.xlu0 %v20
    %v22 = vpop.xlane.xlu0 %21
    %v23 = vsub.f32 %v12, %v19
    %v24 = vsub.f32 %v13, %v22
    %v25 = vmul.f32 %v23, 1.442695
    %v26 = vpow.pop %v25
    %v27 = vmul.f32 %v24, 1.442695
    %v28 = vpow.pop %v27
    %v29 = vlaneseq
    %v30 = vand.u32 %v29, 127
    %31 = vset.pattern.permute.xlu0 0
    %32 = vperm.xlu0 %31, %v14
    %v33 = vpop.permute.xlu0 %32
    %34 = vset.pattern.permute.xlu0 0
    %35 = vperm.xlu0 %34, %v15
    %v36 = vpop.permute.xlu0 %35
    %vm37 = vcmp.eq.s32.totalorder %v30, %v33
    %vm38 = vcmp.eq.s32.totalorder %v30, %v36
    %v39 = vsel %vm37, %v26, 0.0
    %v40 = vsel %vm38, %v28, 0.0
    %v41 = vsel %vm16, %v39, 0.0
    %42 = vadd.xlane.f32.xlu0 %v41
    %v43 = vpop.xlane.xlu0 %42
    %v44 = vsel %vm16, %v40, 0.0
    %45 = vadd.xlane.f32.xlu0 %v44
    %v46 = vpop.xlane.xlu0 %45
    %v47 = vsel %vm16, %v26, 0.0
    %48 = vadd.xlane.f32.xlu0 %v47
    %v49 = vpop.xlane.xlu0 %48
    %v50 = vsel %vm16, %v28, 0.0
    %51 = vadd.xlane.f32.xlu0 %v50
    %v52 = vpop.xlane.xlu0 %51
    %v53 = vrcp.pop %v49
    %v54 = vmul.f32 %v43, %v53
    %v55 = vrcp.pop %v52
    %v56 = vmul.f32 %v46, %v55
    %v57 = vadd.f32 %v54, 1e-07
    %v58 = vadd.f32 %v56, 1e-07
    %v59 = vlog2.pop %v57
    %v60 = vmul.f32 %v59, 0.6931472
    %v61 = vlog2.pop %v58
    %v62 = vmul.f32 %v61, 0.6931472
    %v63 = vmul.f32 %v60, 0.7
    %v64 = vmul.f32 %v62, 0.7
    %v65 = vmul.f32 %v63, 1.442695
    %v66 = vpow.pop %v65
    %v67 = vmul.f32 %v64, 1.442695
    %v68 = vpow.pop %v67
    %v69 = vsub.f32 1.0, %v66
    %v70 = vsub.f32 1.0, %v68
    %v71 = vmul.f32 %v69, 1.4285715
    %v72 = vmul.f32 %v70, 1.4285715
    %73 = vxpose.xlu0.b32.start [1/16] %v71, 128
    %74 = vxpose.xlu0.b32.cont [2/16] %v72, 128
    %75 = vxpose.xlu0.b32.cont [3/16] 0.0, 128
    %76 = vxpose.xlu0.b32.cont [4/16] 0.0, 128
    %77 = vxpose.xlu0.b32.cont [5/16] 0.0, 128
    %78 = vxpose.xlu0.b32.cont [6/16] 0.0, 128
    %79 = vxpose.xlu0.b32.cont [7/16] 0.0, 128
    %80 = vxpose.xlu0.b32.cont [8/16] 0.0, 128
    %81 = vxpose.xlu0.b32.cont [9/16] 0.0, 128
    %82 = vxpose.xlu0.b32.cont [10/16] 0.0, 128
    %83 = vxpose.xlu0.b32.cont [11/16] 0.0, 128
    %84 = vxpose.xlu0.b32.cont [12/16] 0.0, 128
    %85 = vxpose.xlu0.b32.cont [13/16] 0.0, 128
    %86 = vxpose.xlu0.b32.cont [14/16] 0.0, 128
    %87 = vxpose.xlu0.b32.cont [15/16] 0.0, 128
    %88 = vxpose.xlu0.b32.end [16/16] 0.0, 128
    %v89 = vpop.trf.xlu0
    %v90 = vpop.trf.xlu0
    %v91 = vpop.trf.xlu0
    %v92 = vpop.trf.xlu0
    %v93 = vpop.trf.xlu0
    %v94 = vpop.trf.xlu0
    %v95 = vpop.trf.xlu0
    %v96 = vpop.trf.xlu0
    %v97 = vpop.trf.xlu0
    %v98 = vpop.trf.xlu0
    %v99 = vpop.trf.xlu0
    %v100 = vpop.trf.xlu0
    %v101 = vpop.trf.xlu0
    %v102 = vpop.trf.xlu0
    %v103 = vpop.trf.xlu0
    %v104 = vpop.trf.xlu0
    %vm105 = vcmask 122880
    %106 = vst.msk [vmem:[#allocation2] sm:$0x1] %vm105, %v89
    // Predicated region
    $region10: #{tpu_custom_call.1} parent=1 // pred_check
      _
    $region11: #{tpu_custom_call.1} parent=1 // pred_check_branch
      %108 = sbr.rel (0) target = $region13
    $region12: #{tpu_custom_call.1} parent=1 // pred_region
      %s110 = ssub.s32 16, 16
      %111 = vsyncadd [#allocation3], %s110
      %s113 = sshll.u32 [#allocation2], 4
      %s114 = int_to_ptr.vmem [resolvable:$true] %s113
      %116 = dma.vmem_to_hbm [thread:$0]  %s114, 16, %s2, [#allocation3]
    $region13: #{tpu_custom_call.1} parent=1 // pred_fallthru
      _
    // Predicated region
    $region14: #{tpu_custom_call.1} parent=1 // pred_check
      _
    $region15: #{tpu_custom_call.1} parent=1 // pred_check_branch
      %118 = sbr.rel (0) target = $region17
    $region16: #{tpu_custom_call.1} parent=1 // pred_region
      %119 = dma.done [#allocation3], 16
    $region17: #{tpu_custom_call.1} parent=1 // pred_fallthru
      _
    %120 = vsyncpa [#allocation3], 1

</llo_original>
